<compile_context>
chip_gen: v7x
topology: tpu7x:2x2x1
jax: 0.10.0
libtpu: 0.0.40
codegen_flags: <defaults>
</compile_context>

<pallas_src>
import functools

import jax
import jax.numpy as jnp
from jax.experimental import pallas as pl
from jax.experimental.pallas import tpu as pltpu


def _leaky_relu(x, negative_slope=0.2):
    return jnp.where(x >= 0, x, negative_slope * x)


def encoder_kernel(
    x_ref,          # (TB, input_dim)
    w1_ref, b1_ref, # (input_dim, hidden), (1, hidden)
    w2_ref, b2_ref, # (hidden, hidden),    (1, hidden)
    wmv_ref, bmv_ref,  # fused mean|var: (hidden, 2*latent), (1, 2*latent)
    out_ref,        # (TB, 2*latent)  -> [mean | log_var]
):
    x = x_ref[...]

    # h = LeakyReLU(FC_input(x))
    h = jnp.dot(x, w1_ref[...], preferred_element_type=jnp.float32) + b1_ref[...]
    h = _leaky_relu(h)

    # h = LeakyReLU(FC_input2(h))
    h = jnp.dot(h, w2_ref[...], preferred_element_type=jnp.float32) + b2_ref[...]
    h = _leaky_relu(h)

    # [mean | log_var] = h @ [Wm | Wv] + [bm | bv]   (single fused MXU op,
    # single lane-dense output store)
    out = jnp.dot(h, wmv_ref[...], preferred_element_type=jnp.float32) + bmv_ref[...]
    out_ref[...] = out.astype(out_ref.dtype)


def _vmem_budget_bytes(tb, input_dim, hidden_dim, latent_dim):
    f32 = 4
    weights = (
        input_dim * hidden_dim
        + hidden_dim * hidden_dim
        + hidden_dim * 2 * latent_dim
        + 2 * hidden_dim
        + 2 * latent_dim
    ) * f32
    # double-buffered input / output tiles
    io = 2 * (tb * input_dim + tb * 2 * latent_dim) * f32
    # intermediate activations
    act = 2 * tb * hidden_dim * f32
    total = weights + io + act + (4 << 20)  # + headroom
    # stay within v7x's 64 MiB physical VMEM; never request below 16 MiB
    return int(min(max(total, 16 << 20), 64 << 20))


@jax.jit
def encoder_forward(x, params):
    """Returns (mean, log_var), matching Encoder.forward."""
    w1, b1, w2, b2, wm, bm, wv, bv = params
    B = x.shape[0]
    input_dim, hidden_dim = w1.shape
    latent_dim = wm.shape[1]

    # Fuse mean / var projections: one weight, one bias, one output slab.
    wmv = jnp.concatenate([wm, wv], axis=1)          # (hidden, 2*latent)
    bmv = jnp.concatenate([bm, bv], axis=1)          # (1, 2*latent)

    # Batch tile: full batch if small, otherwise 128-row tiles (multiple of 8).
    TB = B if B <= 128 else 128
    nb = pl.cdiv(B, TB)

    # x / out tiles move with the batch grid index; weights use whole-array
    # blocks whose index_map ignores the batch index -> VMEM-resident once.
    x_spec = pl.BlockSpec((TB, input_dim), lambda i: (i, 0))
    out_spec = pl.BlockSpec((TB, 2 * latent_dim), lambda i: (i, 0))
    w_spec = lambda shape: pl.BlockSpec(shape, lambda i: (0, 0))

    out = pl.pallas_call(
        encoder_kernel,
        out_shape=jax.ShapeDtypeStruct((B, 2 * latent_dim), jnp.float32),
        grid=(nb,),
        in_specs=[
            x_spec,
            w_spec((input_dim, hidden_dim)), w_spec((1, hidden_dim)),
            w_spec((hidden_dim, hidden_dim)), w_spec((1, hidden_dim)),
            w_spec((hidden_dim, 2 * latent_dim)), w_spec((1, 2 * latent_dim)),
        ],
        out_specs=out_spec,
        compiler_params=pltpu.CompilerParams(
            dimension_semantics=("parallel",),  # shard batch tiles over v7x's 2 TCs
            vmem_limit_bytes=_vmem_budget_bytes(TB, input_dim, hidden_dim, latent_dim),
        ),
    )(x, w1, b1, w2, b2, wmv, bmv)

    mean = out[:, :latent_dim]
    log_var = out[:, latent_dim:]
    return mean, log_var


def init_params(key, input_dim, hidden_dim, latent_dim):
    """Deterministic init mimicking PyTorch nn.Linear default (U(+-1/sqrt(fan_in)))."""
    ks = jax.random.split(key, 8)

    def linear(kw, kb, fan_in, fan_out):
        bound = 1.0 / jnp.sqrt(fan_in)
        w = jax.random.uniform(kw, (fan_in, fan_out), jnp.float32, -bound, bound)
        b = jax.random.uniform(kb, (1, fan_out), jnp.float32, -bound, bound)
        return w, b

    w1, b1 = linear(ks[0], ks[1], input_dim, hidden_dim)
    w2, b2 = linear(ks[2], ks[3], hidden_dim, hidden_dim)
    wm, bm = linear(ks[4], ks[5], hidden_dim, latent_dim)
    wv, bv = linear(ks[6], ks[7], hidden_dim, latent_dim)
    return (w1, b1, w2, b2, wm, bm, wv, bv)


def reference_forward(x, params):
    """Plain-JAX reference for correctness checking."""
    w1, b1, w2, b2, wm, bm, wv, bv = params
    h = _leaky_relu(x @ w1 + b1)
    h = _leaky_relu(h @ w2 + b2)
    return h @ wm + bm, h @ wv + bv


if __name__ == "__main__":
    key = jax.random.PRNGKey(0)
    k_x, k_p = jax.random.split(key)

    # Small shapes consistent with the module.
    batch = 8
    input_dim = 64
    hidden_dim = 32
    latent_dim = 16

    x = jax.random.normal(k_x, (batch, input_dim), jnp.float32)
    params = init_params(k_p, input_dim, hidden_dim, latent_dim)

    mean, log_var = encoder_forward(x, params)
    jax.block_until_ready((mean, log_var))

    mean_ref, log_var_ref = reference_forward(x, params)
    assert mean.shape == (batch, latent_dim)
    assert log_var.shape == (batch, latent_dim)
    assert jnp.allclose(mean, mean_ref, atol=1e-5, rtol=1e-5)
    assert jnp.allclose(log_var, log_var_ref, atol=1e-5, rtol=1e-5)

    print("KERNEL_OK")
</pallas_src>

<mosaic_0001>
module attributes {stable_mosaic.version = 11 : i64} {
  func.func @encoder_kernel(%arg0: i32, %arg1: memref<8x64xf32, #tpu.memory_space<vmem>>, %arg2: memref<64x32xf32, #tpu.memory_space<vmem>>, %arg3: memref<1x32xf32, #tpu.memory_space<vmem>>, %arg4: memref<32x32xf32, #tpu.memory_space<vmem>>, %arg5: memref<1x32xf32, #tpu.memory_space<vmem>>, %arg6: memref<32x32xf32, #tpu.memory_space<vmem>>, %arg7: memref<1x32xf32, #tpu.memory_space<vmem>>, %arg8: memref<8x32xf32, #tpu.memory_space<vmem>>) attributes {dimension_semantics = [#tpu.dimension_semantics<parallel>], iteration_bounds = array<i64: 1>, scalar_prefetch = 0 : i64, scratch_operands = 0 : i64, tpu.core_type = #tpu.core_type<tc>, window_params = [{transform_indices = @transform_0, window_bounds = array<i64: 8, 64>}, {pipeline_mode = #tpu.pipeline_mode<synchronous>, transform_indices = @transform_1, window_bounds = array<i64: 64, 32>}, {pipeline_mode = #tpu.pipeline_mode<synchronous>, transform_indices = @transform_2, window_bounds = array<i64: 1, 32>}, {pipeline_mode = #tpu.pipeline_mode<synchronous>, transform_indices = @transform_3, window_bounds = array<i64: 32, 32>}, {pipeline_mode = #tpu.pipeline_mode<synchronous>, transform_indices = @transform_4, window_bounds = array<i64: 1, 32>}, {pipeline_mode = #tpu.pipeline_mode<synchronous>, transform_indices = @transform_5, window_bounds = array<i64: 32, 32>}, {pipeline_mode = #tpu.pipeline_mode<synchronous>, transform_indices = @transform_6, window_bounds = array<i64: 1, 32>}, {transform_indices = @transform_7, window_bounds = array<i64: 8, 32>}]} {
    %c0 = arith.constant 0 : index
    %c0_0 = arith.constant 0 : index
    %0 = vector.load %arg1[%c0, %c0_0] : memref<8x64xf32, #tpu.memory_space<vmem>>, vector<8x64xf32>
    %c0_1 = arith.constant 0 : index
    %c0_2 = arith.constant 0 : index
    %1 = vector.load %arg2[%c0_1, %c0_2] : memref<64x32xf32, #tpu.memory_space<vmem>>, vector<64x32xf32>
    %cst = arith.constant dense<0.000000e+00> : vector<8x32xf32>
    %2 = tpu.matmul %0, %1, %cst {dimension_numbers = #tpu.dot_dimension_numbers<[1], [0], [0], [1], [0, 0, 1, 1], [], []>} : vector<8x64xf32>, vector<64x32xf32>, vector<8x32xf32> -> vector<8x32xf32>
    %c0_3 = arith.constant 0 : index
    %c0_4 = arith.constant 0 : index
    %3 = vector.load %arg3[%c0_3, %c0_4] : memref<1x32xf32, #tpu.memory_space<vmem>>, vector<1x32xf32>
    %4 = vector.broadcast %3 : vector<1x32xf32> to vector<8x32xf32>
    %5 = arith.addf %2, %4 : vector<8x32xf32>
    %cst_5 = arith.constant 0.000000e+00 : f32
    %6 = vector.broadcast %cst_5 : f32 to vector<8x32xf32>
    %7 = arith.cmpf oge, %5, %6 : vector<8x32xf32>
    %cst_6 = arith.constant 2.000000e-01 : f32
    %8 = vector.broadcast %cst_6 : f32 to vector<8x32xf32>
    %9 = arith.mulf %8, %5 : vector<8x32xf32>
    %10 = arith.select %7, %5, %9 : vector<8x32xi1>, vector<8x32xf32>
    %c0_7 = arith.constant 0 : index
    %c0_8 = arith.constant 0 : index
    %11 = vector.load %arg4[%c0_7, %c0_8] : memref<32x32xf32, #tpu.memory_space<vmem>>, vector<32x32xf32>
    %cst_9 = arith.constant dense<0.000000e+00> : vector<8x32xf32>
    %12 = tpu.matmul %10, %11, %cst_9 {dimension_numbers = #tpu.dot_dimension_numbers<[1], [0], [0], [1], [0, 0, 1, 1], [], []>} : vector<8x32xf32>, vector<32x32xf32>, vector<8x32xf32> -> vector<8x32xf32>
    %c0_10 = arith.constant 0 : index
    %c0_11 = arith.constant 0 : index
    %13 = vector.load %arg5[%c0_10, %c0_11] : memref<1x32xf32, #tpu.memory_space<vmem>>, vector<1x32xf32>
    %14 = vector.broadcast %13 : vector<1x32xf32> to vector<8x32xf32>
    %15 = arith.addf %12, %14 : vector<8x32xf32>
    %cst_12 = arith.constant 0.000000e+00 : f32
    %16 = vector.broadcast %cst_12 : f32 to vector<8x32xf32>
    %17 = arith.cmpf oge, %15, %16 : vector<8x32xf32>
    %cst_13 = arith.constant 2.000000e-01 : f32
    %18 = vector.broadcast %cst_13 : f32 to vector<8x32xf32>
    %19 = arith.mulf %18, %15 : vector<8x32xf32>
    %20 = arith.select %17, %15, %19 : vector<8x32xi1>, vector<8x32xf32>
    %c0_14 = arith.constant 0 : index
    %c0_15 = arith.constant 0 : index
    %21 = vector.load %arg6[%c0_14, %c0_15] : memref<32x32xf32, #tpu.memory_space<vmem>>, vector<32x32xf32>
    %cst_16 = arith.constant dense<0.000000e+00> : vector<8x32xf32>
    %22 = tpu.matmul %20, %21, %cst_16 {dimension_numbers = #tpu.dot_dimension_numbers<[1], [0], [0], [1], [0, 0, 1, 1], [], []>} : vector<8x32xf32>, vector<32x32xf32>, vector<8x32xf32> -> vector<8x32xf32>
    %c0_17 = arith.constant 0 : index
    %c0_18 = arith.constant 0 : index
    %23 = vector.load %arg7[%c0_17, %c0_18] : memref<1x32xf32, #tpu.memory_space<vmem>>, vector<1x32xf32>
    %24 = vector.broadcast %23 : vector<1x32xf32> to vector<8x32xf32>
    %25 = arith.addf %22, %24 : vector<8x32xf32>
    %c0_19 = arith.constant 0 : index
    %c0_20 = arith.constant 0 : index
    %26 = vector.load %arg8[%c0_19, %c0_20] : memref<8x32xf32, #tpu.memory_space<vmem>>, vector<8x32xf32>
    tpu.vector_store %arg8[%c0_19, %c0_20], %25 {strides = array<i32>} : memref<8x32xf32, #tpu.memory_space<vmem>>, vector<8x32xf32>,
    return
  }
  func.func @transform_0(%arg0: i32) -> (i32, i32) {
    %c0_i32 = arith.constant 0 : i32
    %c0_i32_0 = arith.constant 0 : i32
    return %arg0, %c0_i32 : i32, i32
  }
  func.func @transform_1(%arg0: i32) -> (i32, i32) {
    %c0_i32 = arith.constant 0 : i32
    %c0_i32_0 = arith.constant 0 : i32
    %c0_i32_1 = arith.constant 0 : i32
    return %c0_i32, %c0_i32_0 : i32, i32
  }
  func.func @transform_2(%arg0: i32) -> (i32, i32) {
    %c0_i32 = arith.constant 0 : i32
    %c0_i32_0 = arith.constant 0 : i32
    %c0_i32_1 = arith.constant 0 : i32
    return %c0_i32, %c0_i32_0 : i32, i32
  }
  func.func @transform_3(%arg0: i32) -> (i32, i32) {
    %c0_i32 = arith.constant 0 : i32
    %c0_i32_0 = arith.constant 0 : i32
    %c0_i32_1 = arith.constant 0 : i32
    return %c0_i32, %c0_i32_0 : i32, i32
  }
  func.func @transform_4(%arg0: i32) -> (i32, i32) {
    %c0_i32 = arith.constant 0 : i32
    %c0_i32_0 = arith.constant 0 : i32
    %c0_i32_1 = arith.constant 0 : i32
    return %c0_i32, %c0_i32_0 : i32, i32
  }
  func.func @transform_5(%arg0: i32) -> (i32, i32) {
    %c0_i32 = arith.constant 0 : i32
    %c0_i32_0 = arith.constant 0 : i32
    %c0_i32_1 = arith.constant 0 : i32
    return %c0_i32, %c0_i32_0 : i32, i32
  }
  func.func @transform_6(%arg0: i32) -> (i32, i32) {
    %c0_i32 = arith.constant 0 : i32
    %c0_i32_0 = arith.constant 0 : i32
    %c0_i32_1 = arith.constant 0 : i32
    return %c0_i32, %c0_i32_0 : i32, i32
  }
  func.func @transform_7(%arg0: i32) -> (i32, i32) {
    %c0_i32 = arith.constant 0 : i32
    %c0_i32_0 = arith.constant 0 : i32
    return %arg0, %c0_i32 : i32, i32
  }
}

</mosaic_0001>

<llo_original>
// kernel: encoder_forward.1
$region0: #{encoder_forward.1}
  #allocation0 [shape = 'u32[]', space=smem, size = 0x4, offset = 0x4, fixed_abs, tag = 'smem constant byte address 0x4 - core index']
  #allocation1 [shape = 'u32[144,128]{1,0:T(1,128)}', space=vmem, size = 0x12000, scoped, tag = 'internal scratch']
  %s0 = inlined_call_operand.vmem [shape: f32[8,64], index: 0, kind: input, shape index: {}]
  %s1 = inlined_call_operand.vmem [shape: f32[64,32], index: 1, kind: input, shape index: {}]
  %s2 = inlined_call_operand.vmem [shape: f32[1,32], index: 2, kind: input, shape index: {}]
  %s3 = inlined_call_operand.vmem [shape: f32[32,32], index: 3, kind: input, shape index: {}]
  %s4 = inlined_call_operand.vmem [shape: f32[1,32], index: 4, kind: input, shape index: {}]
  %s5 = inlined_call_operand.vmem [shape: f32[32,32], index: 5, kind: input, shape index: {}]
  %s6 = inlined_call_operand.vmem [shape: f32[1,32], index: 6, kind: input, shape index: {}]
  %s7 = inlined_call_operand.vmem [shape: f32[8,32], index: 7, kind: output, shape index: {}]
  %s8 = sld [smem:[#allocation0]]
  $region38: #{encoder_forward.1} parent=0
    _
  %s10 = ssub.s32 1, %s8
  %s11 = scalar_select 0, %s10, %s8
  // Predicated region
  $region2: #{encoder_forward.1} parent=0 // pred_check
    _
  $region3: #{encoder_forward.1} parent=0 // pred_check_branch
    %13 = sbr.rel (0) target = $region5
  $region4: #{encoder_forward.1} parent=0 // pred_region
    _
  $region5: #{encoder_forward.1} parent=0 // pred_fallthru
    _
  // Predicated region
  $region6: #{encoder_forward.1} parent=0 // pred_check
    _
  $region7: #{encoder_forward.1} parent=0 // pred_check_branch
    %15 = sbr.rel (0) target = $region9
  $region8: #{encoder_forward.1} parent=0 // pred_region
    _
  $region9: #{encoder_forward.1} parent=0 // pred_fallthru
    _
  // Predicated region
  $region10: #{encoder_forward.1} parent=0 // pred_check
    _
  $region11: #{encoder_forward.1} parent=0 // pred_check_branch
    %17 = sbr.rel (0) target = $region13
  $region12: #{encoder_forward.1} parent=0 // pred_region
    _
  $region13: #{encoder_forward.1} parent=0 // pred_fallthru
    _
  // Predicated region
  $region14: #{encoder_forward.1} parent=0 // pred_check
    _
  $region15: #{encoder_forward.1} parent=0 // pred_check_branch
    %19 = sbr.rel (0) target = $region17
  $region16: #{encoder_forward.1} parent=0 // pred_region
    _
  $region17: #{encoder_forward.1} parent=0 // pred_fallthru
    _
  // Predicated region
  $region18: #{encoder_forward.1} parent=0 // pred_check
    _
  $region19: #{encoder_forward.1} parent=0 // pred_check_branch
    %21 = sbr.rel (0) target = $region21
  $region20: #{encoder_forward.1} parent=0 // pred_region
    _
  $region21: #{encoder_forward.1} parent=0 // pred_fallthru
    _
  // Predicated region
  $region22: #{encoder_forward.1} parent=0 // pred_check
    _
  $region23: #{encoder_forward.1} parent=0 // pred_check_branch
    %23 = sbr.rel (0) target = $region25
  $region24: #{encoder_forward.1} parent=0 // pred_region
    _
  $region25: #{encoder_forward.1} parent=0 // pred_fallthru
    _
  // Predicated region
  $region26: #{encoder_forward.1} parent=0 // pred_check
    _
  $region27: #{encoder_forward.1} parent=0 // pred_check_branch
    %25 = sbr.rel (0) target = $region29
  $region28: #{encoder_forward.1} parent=0 // pred_region
    _
  $region29: #{encoder_forward.1} parent=0 // pred_fallthru
    _
  %v26 = vld [vmem:[%s0] sm:$0xff]
  %v27 = vld [vmem:[%s1] sm:$0xff]
  %v28 = vld [vmem:[%s1 + $0x8] sm:$0xff]
  %v29 = vld [vmem:[%s1 + $0x10] sm:$0xff]
  %v30 = vld [vmem:[%s1 + $0x18] sm:$0xff]
  %v31 = vld [vmem:[%s1 + $0x20] sm:$0xff]
  %v32 = vld [vmem:[%s1 + $0x28] sm:$0xff]
  %v33 = vld [vmem:[%s1 + $0x30] sm:$0xff]
  %v34 = vld [vmem:[%s1 + $0x38] sm:$0xff]
  %v35 = vld [vmem:[%s2] sm:$0x1]
  %v37 = vlaneseq
  %v38 = vshrl.u32 %v37, 7
  %v39 = vsub.s32 0, %v38
  %v40 = vrot.slane %v35, %v39
  %vm42 = vcmask 523264
  %v44 = vsel %vm42, %v26, 0
  %46 = vmatprep.subr.mxu0 0.0
  %47 = vmatpush1.msra.mxu0 %v27
  %48 = vmatprep.subr.mxu0 0.0
  %49 = vmatpush1.msra.mxu0 %v28
  %50 = vmatprep.subr.mxu0 0.0
  %51 = vmatpush1.msra.mxu0 %v29
  %52 = vmatprep.subr.mxu0 0.0
  %53 = vmatpush1.msra.mxu0 %v30
  %54 = vmatprep.subr.mxu0 0.0
  %55 = vmatpush1.msra.mxu0 %v31
  %56 = vmatprep.subr.mxu0 0.0
  %57 = vmatpush1.msra.mxu0 %v32
  %58 = vmatprep.subr.mxu0 0.0
  %59 = vmatpush1.msra.mxu0 %v33
  %60 = vmatprep.subr.mxu0 0.0
  %61 = vmatpush1.msra.mxu0 %v34
  %62 = vmatprep.subr.mxu0 0.0
  %63 = vmatpush1.msra.mxu0 0.0
  %64 = vmatprep.subr.mxu0 0.0
  %65 = vmatpush1.msra.mxu0 0.0
  %66 = vmatprep.subr.mxu0 0.0
  %67 = vmatpush1.msra.mxu0 0.0
  %68 = vmatprep.subr.mxu0 0.0
  %69 = vmatpush1.msra.mxu0 0.0
  %70 = vmatprep.subr.mxu0 0.0
  %71 = vmatpush1.msra.mxu0 0.0
  %72 = vmatprep.subr.mxu0 0.0
  %73 = vmatpush1.msra.mxu0 0.0
  %74 = vmatprep.subr.mxu0 0.0
  %75 = vmatpush1.msra.mxu0 0.0
  %76 = vmatprep.subr.mxu0 0.0
  %77 = vmatpush1.msra.mxu0 0.0
  %78 = vmatprep.subr.mxu0 0.0
  %79 = vmatpush1.msra.mxu0 0.0
  %80 = vmatprep.subr.mxu0 0.0
  %81 = vmatpush1.msra.mxu0 0.0
  %82 = vmatprep.subr.mxu0 0.0
  %83 = vmatpush1.msra.mxu0 0.0
  %84 = vmatprep.subr.mxu0 0.0
  %85 = vmatpush1.msra.mxu0 0.0
  %86 = vmatprep.subr.mxu0 0.0
  %87 = vmatpush1.msra.mxu0 0.0
  %88 = vmatprep.subr.mxu0 0.0
  %89 = vmatpush1.msra.mxu0 0.0
  %90 = vmatprep.subr.mxu0 0.0
  %91 = vmatpush1.msra.mxu0 0.0
  %92 = vmatprep.subr.mxu0 0.0
  %93 = vmatpush1.msra.mxu0 0.0
  %94 = vmatprep.subr.mxu0 0.0
  %95 = vmatpush1.msra.mxu0 0.0
  %96 = vmatprep.subr.mxu0 0.0
  %97 = vmatpush1.msra.mxu0 0.0
  %98 = vmatprep.subr.mxu0 0.0
  %99 = vmatpush1.msra.mxu0 0.0
  %100 = vmatprep.subr.mxu0 0.0
  %101 = vmatpush1.msra.mxu0 0.0
  %102 = vmatprep.subr.mxu0 0.0
  %103 = vmatpush1.msra.mxu0 0.0
  %104 = vmatprep.subr.mxu0 0.0
  %105 = vmatpush1.msra.mxu0 0.0
  %106 = vmatprep.subr.mxu0 0.0
  %107 = vmatpush1.msra.mxu0 0.0
  %108 = vmatprep.subr.mxu0 0.0
  %109 = vmatpush1.msra.mxu0 0.0
  %110 = vmatprep.mubr.f32.mxu0 0.0
  %111 = vmatmul.mubr.f32.gmra.mrb[0].mxu0 %v44
  %v112 = vpop.f32.mrb[0].mxu0
  %v113 = vadd.f32 %v40, %v112
  %v114 = vpop.f32.mrb[0].mxu0
  %115 = vdwg.mxu0
  %vm116 = vcmp.ge.f32.partialorder %v113, 0.0
  %v117 = vmul.f32 %v113, 0.2
  %v118 = vsel %vm116, %v113, %v117
  %v119 = vld [vmem:[%s3] sm:$0xff]
  %v120 = vld [vmem:[%s3 + $0x8] sm:$0xff]
  %v121 = vld [vmem:[%s3 + $0x10] sm:$0xff]
  %v122 = vld [vmem:[%s3 + $0x18] sm:$0xff]
  %v123 = vld [vmem:[%s4] sm:$0x1]
  %v125 = vlaneseq
  %v126 = vshrl.u32 %v125, 7
  %v127 = vsub.s32 0, %v126
  %v128 = vrot.slane %v123, %v127
  %vm130 = vcmask 261120
  %v132 = vsel %vm130, %v118, 0
  %134 = vmatprep.subr.mxu0 0.0
  %135 = vmatpush1.msra.mxu0 %v119
  %136 = vmatprep.subr.mxu0 0.0
  %137 = vmatpush1.msra.mxu0 %v120
  %138 = vmatprep.subr.mxu0 0.0
  %139 = vmatpush1.msra.mxu0 %v121
  %140 = vmatprep.subr.mxu0 0.0
  %141 = vmatpush1.msra.mxu0 %v122
  %142 = vmatprep.subr.mxu0 0.0
  %143 = vmatpush1.msra.mxu0 0.0
  %144 = vmatprep.subr.mxu0 0.0
  %145 = vmatpush1.msra.mxu0 0.0
  %146 = vmatprep.subr.mxu0 0.0
  %147 = vmatpush1.msra.mxu0 0.0
  %148 = vmatprep.subr.mxu0 0.0
  %149 = vmatpush1.msra.mxu0 0.0
  %150 = vmatprep.subr.mxu0 0.0
  %151 = vmatpush1.msra.mxu0 0.0
  %152 = vmatprep.subr.mxu0 0.0
  %153 = vmatpush1.msra.mxu0 0.0
  %154 = vmatprep.subr.mxu0 0.0
  %155 = vmatpush1.msra.mxu0 0.0
  %156 = vmatprep.subr.mxu0 0.0
  %157 = vmatpush1.msra.mxu0 0.0
  %158 = vmatprep.subr.mxu0 0.0
  %159 = vmatpush1.msra.mxu0 0.0
  %160 = vmatprep.subr.mxu0 0.0
  %161 = vmatpush1.msra.mxu0 0.0
  %162 = vmatprep.subr.mxu0 0.0
  %163 = vmatpush1.msra.mxu0 0.0
  %164 = vmatprep.subr.mxu0 0.0
  %165 = vmatpush1.msra.mxu0 0.0
  %166 = vmatprep.subr.mxu0 0.0
  %167 = vmatpush1.msra.mxu0 0.0
  %168 = vmatprep.subr.mxu0 0.0
  %169 = vmatpush1.msra.mxu0 0.0
  %170 = vmatprep.subr.mxu0 0.0
  %171 = vmatpush1.msra.mxu0 0.0
  %172 = vmatprep.subr.mxu0 0.0
  %173 = vmatpush1.msra.mxu0 0.0
  %174 = vmatprep.subr.mxu0 0.0
  %175 = vmatpush1.msra.mxu0 0.0
  %176 = vmatprep.subr.mxu0 0.0
  %177 = vmatpush1.msra.mxu0 0.0
  %178 = vmatprep.subr.mxu0 0.0
  %179 = vmatpush1.msra.mxu0 0.0
  %180 = vmatprep.subr.mxu0 0.0
  %181 = vmatpush1.msra.mxu0 0.0
  %182 = vmatprep.subr.mxu0 0.0
  %183 = vmatpush1.msra.mxu0 0.0
  %184 = vmatprep.subr.mxu0 0.0
  %185 = vmatpush1.msra.mxu0 0.0
  %186 = vmatprep.subr.mxu0 0.0
  %187 = vmatpush1.msra.mxu0 0.0
  %188 = vmatprep.subr.mxu0 0.0
  %189 = vmatpush1.msra.mxu0 0.0
  %190 = vmatprep.subr.mxu0 0.0
  %191 = vmatpush1.msra.mxu0 0.0
  %192 = vmatprep.subr.mxu0 0.0
  %193 = vmatpush1.msra.mxu0 0.0
  %194 = vmatprep.subr.mxu0 0.0
  %195 = vmatpush1.msra.mxu0 0.0
  %196 = vmatprep.subr.mxu0 0.0
  %197 = vmatpush1.msra.mxu0 0.0
  %198 = vmatprep.mubr.f32.mxu0 0.0
  %199 = vmatmul.mubr.f32.gmra.mrb[0].mxu0 %v132
  %v200 = vpop.f32.mrb[0].mxu0
  %v201 = vadd.f32 %v128, %v200
  %v202 = vpop.f32.mrb[0].mxu0
  %203 = vdwg.mxu0
  %vm204 = vcmp.ge.f32.partialorder %v201, 0.0
  %v205 = vmul.f32 %v201, 0.2
  %v206 = vsel %vm204, %v201, %v205
  %v207 = vld [vmem:[%s5] sm:$0xff]
  %v208 = vld [vmem:[%s5 + $0x8] sm:$0xff]
  %v209 = vld [vmem:[%s5 + $0x10] sm:$0xff]
  %v210 = vld [vmem:[%s5 + $0x18] sm:$0xff]
  %v211 = vld [vmem:[%s6] sm:$0x1]
  %v213 = vlaneseq
  %v214 = vshrl.u32 %v213, 7
  %v215 = vsub.s32 0, %v214
  %v216 = vrot.slane %v211, %v215
  %v219 = vsel %vm130, %v206, 0
  %221 = vmatprep.subr.mxu0 0.0
  %222 = vmatpush1.msra.mxu0 %v207
  %223 = vmatprep.subr.mxu0 0.0
  %224 = vmatpush1.msra.mxu0 %v208
  %225 = vmatprep.subr.mxu0 0.0
  %226 = vmatpush1.msra.mxu0 %v209
  %227 = vmatprep.subr.mxu0 0.0
  %228 = vmatpush1.msra.mxu0 %v210
  %229 = vmatprep.subr.mxu0 0.0
  %230 = vmatpush1.msra.mxu0 0.0
  %231 = vmatprep.subr.mxu0 0.0
  %232 = vmatpush1.msra.mxu0 0.0
  %233 = vmatprep.subr.mxu0 0.0
  %234 = vmatpush1.msra.mxu0 0.0
  %235 = vmatprep.subr.mxu0 0.0
  %236 = vmatpush1.msra.mxu0 0.0
  %237 = vmatprep.subr.mxu0 0.0
  %238 = vmatpush1.msra.mxu0 0.0
  %239 = vmatprep.subr.mxu0 0.0
  %240 = vmatpush1.msra.mxu0 0.0
  %241 = vmatprep.subr.mxu0 0.0
  %242 = vmatpush1.msra.mxu0 0.0
  %243 = vmatprep.subr.mxu0 0.0
  %244 = vmatpush1.msra.mxu0 0.0
  %245 = vmatprep.subr.mxu0 0.0
  %246 = vmatpush1.msra.mxu0 0.0
  %247 = vmatprep.subr.mxu0 0.0
  %248 = vmatpush1.msra.mxu0 0.0
  %249 = vmatprep.subr.mxu0 0.0
  %250 = vmatpush1.msra.mxu0 0.0
  %251 = vmatprep.subr.mxu0 0.0
  %252 = vmatpush1.msra.mxu0 0.0
  %253 = vmatprep.subr.mxu0 0.0
  %254 = vmatpush1.msra.mxu0 0.0
  %255 = vmatprep.subr.mxu0 0.0
  %256 = vmatpush1.msra.mxu0 0.0
  %257 = vmatprep.subr.mxu0 0.0
  %258 = vmatpush1.msra.mxu0 0.0
  %259 = vmatprep.subr.mxu0 0.0
  %260 = vmatpush1.msra.mxu0 0.0
  %261 = vmatprep.subr.mxu0 0.0
  %262 = vmatpush1.msra.mxu0 0.0
  %263 = vmatprep.subr.mxu0 0.0
  %264 = vmatpush1.msra.mxu0 0.0
  %265 = vmatprep.subr.mxu0 0.0
  %266 = vmatpush1.msra.mxu0 0.0
  %267 = vmatprep.subr.mxu0 0.0
  %268 = vmatpush1.msra.mxu0 0.0
  %269 = vmatprep.subr.mxu0 0.0
  %270 = vmatpush1.msra.mxu0 0.0
  %271 = vmatprep.subr.mxu0 0.0
  %272 = vmatpush1.msra.mxu0 0.0
  %273 = vmatprep.subr.mxu0 0.0
  %274 = vmatpush1.msra.mxu0 0.0
  %275 = vmatprep.subr.mxu0 0.0
  %276 = vmatpush1.msra.mxu0 0.0
  %277 = vmatprep.subr.mxu0 0.0
  %278 = vmatpush1.msra.mxu0 0.0
  %279 = vmatprep.subr.mxu0 0.0
  %280 = vmatpush1.msra.mxu0 0.0
  %281 = vmatprep.subr.mxu0 0.0
  %282 = vmatpush1.msra.mxu0 0.0
  %283 = vmatprep.subr.mxu0 0.0
  %284 = vmatpush1.msra.mxu0 0.0
  %285 = vmatprep.mubr.f32.mxu0 0.0
  %286 = vmatmul.mubr.f32.gmra.mrb[0].mxu0 %v219
  %v287 = vpop.f32.mrb[0].mxu0
  %v288 = vadd.f32 %v216, %v287
  %v289 = vpop.f32.mrb[0].mxu0
  %290 = vdwg.mxu0
  %291 = vst.msk [vmem:[%s7] sm:$0xff] %vm130, %v288
  // Predicated region
  $region30: #{encoder_forward.1} parent=0 // pred_check
    _
  $region31: #{encoder_forward.1} parent=0 // pred_check_branch
    %293 = sbr.rel (0) target = $region33
  $region32: #{encoder_forward.1} parent=0 // pred_region
    _
  $region33: #{encoder_forward.1} parent=0 // pred_fallthru
    _
  // Predicated region
  $region34: #{encoder_forward.1} parent=0 // pred_check
    _
  $region35: #{encoder_forward.1} parent=0 // pred_check_branch
    %295 = sbr.rel (0) target = $region37
  $region36: #{encoder_forward.1} parent=0 // pred_region
    _
  $region37: #{encoder_forward.1} parent=0 // pred_fallthru
    _

</llo_original>
